<compile_context>
chip_gen: v7x
topology: tpu7x:2x2x1
jax: 0.10.0
libtpu: 0.0.40
codegen_flags: <defaults>
</compile_context>

<pallas_src>
import functools

import jax
import jax.numpy as jnp
from jax import lax
from jax.experimental import pallas as pl
from jax.experimental.pallas import tpu as pltpu

_BN_EPS = 1e-5
_VPU_CONV_MAX = 512            # VPU broadcast-FMA conv when c_in * c_out <= this
_LANE_TILE_MAX = 4096          # max spatial (lane) tile
_BLOCK_BYTES_BUDGET = 4 << 20  # ~4 MiB of f32 per (x + out) block
_MXU_BT_MAX = 8                # cap static unroll of per-row matmuls


def _conv1x1(x, w, use_mxu):
    """x: (BT, C_in, T) f32, w: (C_out, C_in) f32 -> (BT, C_out, T) f32."""
    bt, c_in, _ = x.shape
    if use_mxu:
        # Per-batch-row matmul keeps channels on sublanes / spatial on lanes
        # (no relayout) while still allowing multi-row blocks for DMA size.
        rows = [jnp.dot(w, x[b], preferred_element_type=jnp.float32)
                for b in range(bt)]
        if bt == 1:
            return rows[0][None]
        return jnp.stack(rows, axis=0)
    # VPU broadcast-FMA: y[:, o, :] = sum_ci w[o, ci] * x[:, ci, :]
    acc = x[:, 0:1, :] * w[:, 0:1][None]            # (BT,1,T) * (1,C_out,1)
    for ci in range(1, c_in):
        acc = acc + x[:, ci:ci + 1, :] * w[:, ci:ci + 1][None]
    return acc


def _stats_kernel(x_ref, w_ref, stat_ref, *, use_mxu):
    """Accumulate per-output-channel [sum; sum-of-squares] of conv(relu(x))."""
    @pl.when((pl.program_id(0) == 0) & (pl.program_id(1) == 0))
    def _():
        stat_ref[...] = jnp.zeros_like(stat_ref)

    x = jnp.maximum(x_ref[...].astype(jnp.float32), 0.0)        # ReLU
    y = _conv1x1(x, w_ref[...].astype(jnp.float32), use_mxu)    # (BT, C_out, T)
    ysum = jnp.sum(y, axis=(0, 2))[None]                        # (1, C_out)
    ysq = jnp.sum(y * y, axis=(0, 2))[None]                     # (1, C_out)
    stat_ref[...] += jnp.concatenate([ysum, ysq], axis=0)       # (2, C_out)


def _apply_kernel(x_ref, w_ref, b_ref, o_ref, *, use_mxu):
    """out = w_eff @ relu(x) + b_eff   (batch-norm folded into w_eff / b_eff)."""
    x = jnp.maximum(x_ref[...].astype(jnp.float32), 0.0)
    y = _conv1x1(x, w_ref[...].astype(jnp.float32), use_mxu)
    y = y + b_ref[...].astype(jnp.float32)[None]                 # (1, C_out, 1)
    o_ref[...] = y.astype(o_ref.dtype)


def _pick_tiles(n, c_in, c_out, hw, use_mxu, max_lane_tile, max_batch_tile):
    """Choose (batch tile, spatial tile) that divide the dims, fit the budget."""
    # Spatial (lane) tile: a multiple of 128 dividing hw, else the full dim.
    if hw % 128 == 0 and hw > 128:
        t_hw = max(128, min(hw, (max_lane_tile // 128) * 128))
        while hw % t_hw != 0:
            t_hw -= 128
    else:
        t_hw = hw                      # full dim (allowed when == array dim)
    # Batch tile: as large as the byte budget allows (covers x + out rows).
    per_b = (c_in + c_out) * t_hw * 4  # f32 bytes per batch row of one block
    bt = max(1, min(n, _BLOCK_BYTES_BUDGET // max(per_b, 1)))
    if use_mxu:
        bt = min(bt, _MXU_BT_MAX)      # bound static unroll of per-row matmuls
    if max_batch_tile is not None:
        bt = min(bt, max_batch_tile)
    bt = max(1, bt)
    while n % bt != 0:
        bt -= 1
    return bt, t_hw


def relu_conv1x1_bn(x_nchw, w_oi, *, eps=_BN_EPS,
                    max_lane_tile=_LANE_TILE_MAX, max_batch_tile=None):
    """BatchNorm2d(affine=False, training)(Conv2d 1x1, no bias)(ReLU(x)).

    x_nchw: (N, C_in, H, W);  w_oi: (C_out, C_in).  Returns (N, C_out, H, W).
    """
    n, c_in, h, w_sp = x_nchw.shape
    c_out = w_oi.shape[0]
    hw = h * w_sp
    m_total = n * hw

    x3 = x_nchw.reshape(n, c_in, hw)   # free view: channels->sublane, HW->lane
    w_oi = w_oi.astype(jnp.float32)

    use_mxu = (c_in * c_out) > _VPU_CONV_MAX
    bt, t_hw = _pick_tiles(n, c_in, c_out, hw, use_mxu,
                           max_lane_tile, max_batch_tile)
    grid = (n // bt, hw // t_hw)

    conv_flops = 2 * m_total * c_in * c_out
    x_bytes = int(x3.size) * x3.dtype.itemsize
    w_bytes = c_out * c_in * 4
    out_bytes = m_total * c_out * x3.dtype.itemsize

    # ---- pass 1: accumulate per-channel sum / sum-of-squares of conv(relu(x))
    stats = pl.pallas_call(
        functools.partial(_stats_kernel, use_mxu=use_mxu),
        out_shape=jax.ShapeDtypeStruct((2, c_out), jnp.float32),
        grid=grid,
        in_specs=[
            pl.BlockSpec((bt, c_in, t_hw), lambda b, t: (b, 0, t)),
            pl.BlockSpec((c_out, c_in), lambda b, t: (0, 0)),
        ],
        out_specs=pl.BlockSpec((2, c_out), lambda b, t: (0, 0)),
        compiler_params=pltpu.CompilerParams(
            dimension_semantics=("arbitrary", "arbitrary")),
        cost_estimate=pl.CostEstimate(
            flops=conv_flops + 3 * m_total * c_out,
            transcendentals=0,
            bytes_accessed=x_bytes + w_bytes + 8 * c_out),
    )(x3, w_oi)

    # ---- finalize batch-norm stats (tiny) and fold them into the conv ----
    mean = stats[0] / m_total                                    # (C_out,)
    var = jnp.maximum(stats[1] / m_total - mean * mean, 0.0)     # biased var
    inv = lax.rsqrt(var + eps)
    w_eff = inv[:, None] * w_oi                                  # (C_out, C_in)
    b_eff = (-mean * inv)[:, None]                               # (C_out, 1)

    # ---- pass 2: out = w_eff @ relu(x) + b_eff, fully parallel over tiles ----
    out3 = pl.pallas_call(
        functools.partial(_apply_kernel, use_mxu=use_mxu),
        out_shape=jax.ShapeDtypeStruct((n, c_out, hw), x_nchw.dtype),
        grid=grid,
        in_specs=[
            pl.BlockSpec((bt, c_in, t_hw), lambda b, t: (b, 0, t)),
            pl.BlockSpec((c_out, c_in), lambda b, t: (0, 0)),
            pl.BlockSpec((c_out, 1), lambda b, t: (0, 0)),
        ],
        out_specs=pl.BlockSpec((bt, c_out, t_hw), lambda b, t: (b, 0, t)),
        compiler_params=pltpu.CompilerParams(
            dimension_semantics=("parallel", "parallel")),
        cost_estimate=pl.CostEstimate(
            flops=conv_flops + 2 * m_total * c_out,
            transcendentals=0,
            bytes_accessed=x_bytes + w_bytes + 4 * c_out + out_bytes),
    )(x3, w_eff, b_eff)

    return out3.reshape(n, c_out, h, w_sp)   # free view: no transpose


class Calibration:
    """JAX/Pallas port of the PyTorch Calibration module (forward only)."""

    def __init__(self, in_channels, out_channels, key=None):
        self.in_channels = in_channels
        self.out_channels = out_channels
        self.w = None
        if in_channels != out_channels:
            if key is None:
                key = jax.random.PRNGKey(42)
            # Conv2d(in, out, 1, bias=False) weight (out, in, 1, 1);
            # deterministic kaiming-uniform-like init, stored as (C_out, C_in).
            bound = (1.0 / in_channels) ** 0.5
            w_oihw = jax.random.uniform(
                key, (out_channels, in_channels, 1, 1),
                minval=-bound, maxval=bound, dtype=jnp.float32)
            self.w = w_oihw[:, :, 0, 0]

    def __call__(self, x_nchw):
        if self.w is None:
            return x_nchw
        return relu_conv1x1_bn(x_nchw, self.w)


def _reference(x_nchw, w_oi, eps=_BN_EPS):
    """Plain-JAX reference: ReLU -> 1x1 conv -> BN(train, affine=False)."""
    x = jnp.maximum(x_nchw, 0.0)
    y = jnp.einsum("nchw,oc->nohw", x, w_oi)
    mean = jnp.mean(y, axis=(0, 2, 3), keepdims=True)
    var = jnp.mean((y - mean) ** 2, axis=(0, 2, 3), keepdims=True)
    return (y - mean) / jnp.sqrt(var + eps)


if __name__ == "__main__":
    key = jax.random.PRNGKey(0)
    kx, kw1, kx2, kw2 = jax.random.split(key, 4)

    # Case 1: in_channels != out_channels -> StdConv path (VPU conv, 1 tile).
    N, C_IN, C_OUT, H, W = 2, 4, 8, 16, 16
    x = jax.random.normal(kx, (N, C_IN, H, W), dtype=jnp.float32)
    calib = Calibration(C_IN, C_OUT, key=kw1)
    out = jax.block_until_ready(calib(x))
    ref = _reference(x, calib.w)
    assert out.shape == (N, C_OUT, H, W)
    assert jnp.allclose(out, ref, atol=2e-4, rtol=2e-4), \
        float(jnp.max(jnp.abs(out - ref)))

    # Case 2: force small tiles -> multi-step grid; exercises the
    # accumulate/finalize batch-norm split and the pipelined tiling path.
    out_tiled = jax.block_until_ready(
        relu_conv1x1_bn(x, calib.w, max_lane_tile=128, max_batch_tile=1))
    assert jnp.allclose(out_tiled, ref, atol=2e-4, rtol=2e-4), \
        float(jnp.max(jnp.abs(out_tiled - ref)))

    # Case 3: larger channel count -> MXU conv path with multi-row blocks.
    C2_IN, C2_OUT = 32, 48
    x2 = jax.random.normal(kx2, (2, C2_IN, 16, 16), dtype=jnp.float32)
    w2 = 0.1 * jax.random.normal(kw2, (C2_OUT, C2_IN), dtype=jnp.float32)
    out2 = jax.block_until_ready(relu_conv1x1_bn(x2, w2))
    ref2 = _reference(x2, w2)
    assert jnp.allclose(out2, ref2, atol=2e-4, rtol=2e-4), \
        float(jnp.max(jnp.abs(out2 - ref2)))

    # Case 4: in_channels == out_channels -> identity.
    calib_id = Calibration(C_IN, C_IN)
    out_id = jax.block_until_ready(calib_id(x))
    assert jnp.array_equal(out_id, x)

    print("KERNEL_OK")
</pallas_src>

<mosaic_0001>
module attributes {stable_mosaic.version = 11 : i64} {
  func.func @_stats_kernel(%arg0: i32, %arg1: i32, %arg2: memref<2x4x256xf32, #tpu.memory_space<vmem>>, %arg3: memref<8x4xf32, #tpu.memory_space<vmem>>, %arg4: memref<2x8xf32, #tpu.memory_space<vmem>>) attributes {dimension_semantics = [#tpu.dimension_semantics<arbitrary>, #tpu.dimension_semantics<arbitrary>], iteration_bounds = array<i64: 1, 1>, scalar_prefetch = 0 : i64, scratch_operands = 0 : i64, tpu.core_type = #tpu.core_type<tc>, window_params = [{transform_indices = @transform_0, window_bounds = array<i64: 2, 4, 256>}, {pipeline_mode = #tpu.pipeline_mode<synchronous>, transform_indices = @transform_1, window_bounds = array<i64: 8, 4>}, {pipeline_mode = #tpu.pipeline_mode<synchronous>, transform_indices = @transform_2, window_bounds = array<i64: 2, 8>}]} {
    %c0_i32 = arith.constant 0 : i32
    %0 = arith.cmpi eq, %arg0, %c0_i32 : i32
    %c0_i32_0 = arith.constant 0 : i32
    %1 = arith.cmpi eq, %arg1, %c0_i32_0 : i32
    %2 = arith.andi %0, %1 : i1
    %3 = arith.extui %2 : i1 to i32
    %c0_i32_1 = arith.constant 0 : i32
    %4 = arith.cmpi ne, %3, %c0_i32_1 : i32
    scf.if %4 {
      %cst_12 = arith.constant 0.000000e+00 : f32
      %45 = vector.broadcast %cst_12 : f32 to vector<2x8xf32>
      %c0_13 = arith.constant 0 : index
      %c0_14 = arith.constant 0 : index
      %46 = vector.load %arg4[%c0_13, %c0_14] : memref<2x8xf32, #tpu.memory_space<vmem>>, vector<2x8xf32>
      tpu.vector_store %arg4[%c0_13, %c0_14], %45 {strides = array<i32>} : memref<2x8xf32, #tpu.memory_space<vmem>>, vector<2x8xf32>,
    } else {
    }
    %c0 = arith.constant 0 : index
    %c0_2 = arith.constant 0 : index
    %c0_3 = arith.constant 0 : index
    %5 = vector.load %arg2[%c0, %c0_2, %c0_3] : memref<2x4x256xf32, #tpu.memory_space<vmem>>, vector<2x4x256xf32>
    %cst = arith.constant 0.000000e+00 : f32
    %6 = vector.broadcast %cst : f32 to vector<2x4x256xf32>
    %7 = arith.maximumf %5, %6 : vector<2x4x256xf32>
    %c0_4 = arith.constant 0 : index
    %c0_5 = arith.constant 0 : index
    %8 = vector.load %arg3[%c0_4, %c0_5] : memref<8x4xf32, #tpu.memory_space<vmem>>, vector<8x4xf32>
    %9 = vector.extract_strided_slice %7 {offsets = [0, 0, 0], sizes = [2, 1, 256], strides = [1, 1, 1]} : vector<2x4x256xf32> to vector<2x1x256xf32>
    %10 = vector.extract_strided_slice %8 {offsets = [0, 0], sizes = [8, 1], strides = [1, 1]} : vector<8x4xf32> to vector<8x1xf32>
    %11 = vector.shape_cast %10 : vector<8x1xf32> to vector<1x8x1xf32>
    %12 = vector.broadcast %9 : vector<2x1x256xf32> to vector<2x8x256xf32>
    %13 = vector.broadcast %11 : vector<1x8x1xf32> to vector<2x8x256xf32>
    %14 = arith.mulf %12, %13 : vector<2x8x256xf32>
    %15 = vector.extract_strided_slice %7 {offsets = [0, 1, 0], sizes = [2, 1, 256], strides = [1, 1, 1]} : vector<2x4x256xf32> to vector<2x1x256xf32>
    %16 = vector.extract_strided_slice %8 {offsets = [0, 1], sizes = [8, 1], strides = [1, 1]} : vector<8x4xf32> to vector<8x1xf32>
    %17 = vector.shape_cast %16 : vector<8x1xf32> to vector<1x8x1xf32>
    %18 = vector.broadcast %15 : vector<2x1x256xf32> to vector<2x8x256xf32>
    %19 = vector.broadcast %17 : vector<1x8x1xf32> to vector<2x8x256xf32>
    %20 = arith.mulf %18, %19 : vector<2x8x256xf32>
    %21 = arith.addf %14, %20 : vector<2x8x256xf32>
    %22 = vector.extract_strided_slice %7 {offsets = [0, 2, 0], sizes = [2, 1, 256], strides = [1, 1, 1]} : vector<2x4x256xf32> to vector<2x1x256xf32>
    %23 = vector.extract_strided_slice %8 {offsets = [0, 2], sizes = [8, 1], strides = [1, 1]} : vector<8x4xf32> to vector<8x1xf32>
    %24 = vector.shape_cast %23 : vector<8x1xf32> to vector<1x8x1xf32>
    %25 = vector.broadcast %22 : vector<2x1x256xf32> to vector<2x8x256xf32>
    %26 = vector.broadcast %24 : vector<1x8x1xf32> to vector<2x8x256xf32>
    %27 = arith.mulf %25, %26 : vector<2x8x256xf32>
    %28 = arith.addf %21, %27 : vector<2x8x256xf32>
    %29 = vector.extract_strided_slice %7 {offsets = [0, 3, 0], sizes = [2, 1, 256], strides = [1, 1, 1]} : vector<2x4x256xf32> to vector<2x1x256xf32>
    %30 = vector.extract_strided_slice %8 {offsets = [0, 3], sizes = [8, 1], strides = [1, 1]} : vector<8x4xf32> to vector<8x1xf32>
    %31 = vector.shape_cast %30 : vector<8x1xf32> to vector<1x8x1xf32>
    %32 = vector.broadcast %29 : vector<2x1x256xf32> to vector<2x8x256xf32>
    %33 = vector.broadcast %31 : vector<1x8x1xf32> to vector<2x8x256xf32>
    %34 = arith.mulf %32, %33 : vector<2x8x256xf32>
    %35 = arith.addf %28, %34 : vector<2x8x256xf32>
    %cst_6 = arith.constant dense<0.000000e+00> : vector<8xf32>
    %36 = vector.multi_reduction <add>, %35, %cst_6 [0, 2] : vector<2x8x256xf32> to vector<8xf32>
    %37 = vector.shape_cast %36 : vector<8xf32> to vector<1x8xf32>
    %38 = arith.mulf %35, %35 : vector<2x8x256xf32>
    %cst_7 = arith.constant dense<0.000000e+00> : vector<8xf32>
    %39 = vector.multi_reduction <add>, %38, %cst_7 [0, 2] : vector<2x8x256xf32> to vector<8xf32>
    %40 = vector.shape_cast %39 : vector<8xf32> to vector<1x8xf32>
    %c0_8 = arith.constant 0 : index
    %c0_9 = arith.constant 0 : index
    %41 = vector.load %arg4[%c0_8, %c0_9] : memref<2x8xf32, #tpu.memory_space<vmem>>, vector<2x8xf32>
    %42 = tpu.concatenate %37, %40 in 0 : vector<1x8xf32>, vector<1x8xf32> -> vector<2x8xf32>
    %43 = arith.addf %41, %42 : vector<2x8xf32>
    %c0_10 = arith.constant 0 : index
    %c0_11 = arith.constant 0 : index
    %44 = vector.load %arg4[%c0_10, %c0_11] : memref<2x8xf32, #tpu.memory_space<vmem>>, vector<2x8xf32>
    tpu.vector_store %arg4[%c0_10, %c0_11], %43 {strides = array<i32>} : memref<2x8xf32, #tpu.memory_space<vmem>>, vector<2x8xf32>,
    return
  }
  func.func @transform_0(%arg0: i32, %arg1: i32) -> (i32, i32, i32) {
    %c0_i32 = arith.constant 0 : i32
    %c0_i32_0 = arith.constant 0 : i32
    return %arg0, %c0_i32, %arg1 : i32, i32, i32
  }
  func.func @transform_1(%arg0: i32, %arg1: i32) -> (i32, i32) {
    %c0_i32 = arith.constant 0 : i32
    %c0_i32_0 = arith.constant 0 : i32
    %c0_i32_1 = arith.constant 0 : i32
    return %c0_i32, %c0_i32_0 : i32, i32
  }
  func.func @transform_2(%arg0: i32, %arg1: i32) -> (i32, i32) {
    %c0_i32 = arith.constant 0 : i32
    %c0_i32_0 = arith.constant 0 : i32
    %c0_i32_1 = arith.constant 0 : i32
    return %c0_i32, %c0_i32_0 : i32, i32
  }
}

</mosaic_0001>

<llo_original>
// kernel: tpu_custom_call.1
$region0: #{tpu_custom_call.1}
  #allocation0 [shape = 'u32[]', space=smem, size = 0x4, offset = 0x4, fixed_abs, tag = 'smem constant byte address 0x4 - core index']
  #allocation1 [shape = 'u32[144,128]{1,0:T(1,128)}', space=vmem, size = 0x12000, scoped, tag = 'internal scratch']
  %s0 = inlined_call_operand.hbm [shape: f32[2,4,256], index: 0, kind: input, shape index: {}]
  %s1 = inlined_call_operand.vmem [shape: f32[8,4], index: 1, kind: input, shape index: {}]
  %s2 = inlined_call_operand.hbm [shape: f32[2,8], index: 2, kind: output, shape index: {}]
  %s3 = sld [smem:[#allocation0]]
  $region26: #{tpu_custom_call.1} parent=0
    _
  %s5 = ssub.s32 1, %s3
  %s6 = scalar_select 0, %s5, %s3
  $region1: #{tpu_custom_call.1} parent=0
    #allocation2 [shape = 'u8[8192]{0}', space=vmem, size = 0x2000, scoped, tag = 'input window, operand 0, single buffered']
    #allocation3 [shape = 's32[1]{0}', space=sflag, size = 0x4, scoped, tag = 'scoped memory for tpu_custom_call.1']
    #allocation4 [shape = 's32[1]{0}', space=sflag, size = 0x4, scoped, tag = 'scoped memory for tpu_custom_call.1']
    #allocation5 [shape = 'u8[1024]{0}', space=vmem, size = 0x400, scoped, tag = 'output window, operand 0, single buffered']
    %7 = vsyncpa [#allocation3], 0
    %8 = vsyncpa [#allocation4], 0
    // Predicated region
    $region2: #{tpu_custom_call.1} parent=1 // pred_check
      _
    $region3: #{tpu_custom_call.1} parent=1 // pred_check_branch
      %10 = sbr.rel (0) target = $region5
    $region4: #{tpu_custom_call.1} parent=1 // pred_region
      %s12 = ssub.s32 256, 256
      %13 = vsyncadd [#allocation3], %s12
      %s14 = sshll.u32 [#allocation2], 4
      %s15 = int_to_ptr.vmem [resolvable:$true] %s14
      %20 = dma.hbm_to_vmem [thread:$0]  %s0, 256, %s15, [#allocation3], 128, 128, 8
    $region5: #{tpu_custom_call.1} parent=1 // pred_fallthru
      _
    // Predicated region
    $region6: #{tpu_custom_call.1} parent=1 // pred_check
      _
    $region7: #{tpu_custom_call.1} parent=1 // pred_check_branch
      %22 = sbr.rel (0) target = $region9
    $region8: #{tpu_custom_call.1} parent=1 // pred_region
      _
    $region9: #{tpu_custom_call.1} parent=1 // pred_fallthru
      _
    // Predicated region
    $region10: #{tpu_custom_call.1} parent=1 // pred_check
      _
    $region11: #{tpu_custom_call.1} parent=1 // pred_check_branch
      %24 = sbr.rel (0) target = $region13
    $region12: #{tpu_custom_call.1} parent=1 // pred_region
      %25 = dma.done [#allocation3], 256
    $region13: #{tpu_custom_call.1} parent=1 // pred_fallthru
      _
    %p26 = scmp.eq.s32.totalorder 0, 0
    %p27 = scmp.eq.s32.totalorder 0, 0
    %p28 = pnand %p26, %p27
    %p29 = pneg %p28
    // Predicated region
    $region14: #{tpu_custom_call.1} parent=1 // pred_check
      _
    $region15: #{tpu_custom_call.1} parent=1 // pred_check_branch
      %31 = sbr.rel (%p28) target = $region17
    $region16: #{tpu_custom_call.1} parent=1 // pred_region
      %vm32 = vcmask 58368
      %33 = vst.msk [vmem:[#allocation5] sm:$0x3] %vm32, 0.0
    $region17: #{tpu_custom_call.1} parent=1 // pred_fallthru
      _
    %v34 = vld [vmem:[#allocation2] sm:$0xff]
    %v35 = vld [vmem:[#allocation2 + $0x8] sm:$0xff]
    %v36 = vmax.f32 %v34, 0.0
    %v37 = vmax.f32 %v35, 0.0
    %v38 = vld [vmem:[%s1] sm:$0xff]
    %v41 = vlaneseq
    %v42 = vshrl.u32 %v41, 7
    %v43 = vsub.s32 0, %v42
    %v44 = vrot.slane %v36, %v43
    %v45 = vlaneseq
    %v46 = vshrl.u32 %v45, 7
    %v47 = vsub.s32 4, %v46
    %v48 = vrot.slane %v36, %v47
    %v49 = vlaneseq
    %v50 = vshrl.u32 %v49, 7
    %v51 = vsub.s32 0, %v50
    %v52 = vrot.slane %v37, %v51
    %v53 = vlaneseq
    %v54 = vshrl.u32 %v53, 7
    %v55 = vsub.s32 4, %v54
    %v56 = vrot.slane %v37, %v55
    %v61 = vlaneseq
    %v62 = vshrl.u32 %v61, 7
    %v63 = vsub.s32 0, %v62
    %v64 = vrot.slane %v44, %v63
    %v65 = vlaneseq
    %v66 = vshrl.u32 %v65, 7
    %v67 = vsub.s32 0, %v66
    %v68 = vrot.slane %v48, %v67
    %v69 = vlaneseq
    %v70 = vshrl.u32 %v69, 7
    %v71 = vsub.s32 0, %v70
    %v72 = vrot.slane %v52, %v71
    %v73 = vlaneseq
    %v74 = vshrl.u32 %v73, 7
    %v75 = vsub.s32 0, %v74
    %v76 = vrot.slane %v56, %v75
    %78 = vset.pattern.permute.xlu0 0
    %79 = vperm.xlu0 %78, %v38
    %v80 = vpop.permute.xlu0 %79
    %v82 = vmul.f32 %v64, %v80
    %v83 = vmul.f32 %v68, %v80
    %v84 = vmul.f32 %v72, %v80
    %v85 = vmul.f32 %v76, %v80
    %v86 = vlaneseq
    %v87 = vshrl.u32 %v86, 7
    %v88 = vsub.s32 1, %v87
    %v89 = vrot.slane %v36, %v88
    %v90 = vlaneseq
    %v91 = vshrl.u32 %v90, 7
    %v92 = vsub.s32 5, %v91
    %v93 = vrot.slane %v36, %v92
    %v94 = vlaneseq
    %v95 = vshrl.u32 %v94, 7
    %v96 = vsub.s32 1, %v95
    %v97 = vrot.slane %v37, %v96
    %v98 = vlaneseq
    %v99 = vshrl.u32 %v98, 7
    %v100 = vsub.s32 5, %v99
    %v101 = vrot.slane %v37, %v100
    %v106 = vlaneseq
    %v107 = vshrl.u32 %v106, 7
    %v108 = vsub.s32 1, %v107
    %v109 = vrot.slane %v89, %v108
    %v110 = vlaneseq
    %v111 = vshrl.u32 %v110, 7
    %v112 = vsub.s32 1, %v111
    %v113 = vrot.slane %v93, %v112
    %v114 = vlaneseq
    %v115 = vshrl.u32 %v114, 7
    %v116 = vsub.s32 1, %v115
    %v117 = vrot.slane %v97, %v116
    %v118 = vlaneseq
    %v119 = vshrl.u32 %v118, 7
    %v120 = vsub.s32 1, %v119
    %v121 = vrot.slane %v101, %v120
    %122 = vset.pattern.permute.xlu0 1
    %123 = vperm.xlu0 %122, %v38
    %v124 = vpop.permute.xlu0 %123
    %v126 = vmul.f32 %v109, %v124
    %v127 = vmul.f32 %v113, %v124
    %v128 = vmul.f32 %v117, %v124
    %v129 = vmul.f32 %v121, %v124
    %v130 = vadd.f32 %v82, %v126
    %v131 = vadd.f32 %v83, %v127
    %v132 = vadd.f32 %v84, %v128
    %v133 = vadd.f32 %v85, %v129
    %v134 = vlaneseq
    %v135 = vshrl.u32 %v134, 7
    %v136 = vsub.s32 2, %v135
    %v137 = vrot.slane %v36, %v136
    %v138 = vlaneseq
    %v139 = vshrl.u32 %v138, 7
    %v140 = vsub.s32 6, %v139
    %v141 = vrot.slane %v36, %v140
    %v142 = vlaneseq
    %v143 = vshrl.u32 %v142, 7
    %v144 = vsub.s32 2, %v143
    %v145 = vrot.slane %v37, %v144
    %v146 = vlaneseq
    %v147 = vshrl.u32 %v146, 7
    %v148 = vsub.s32 6, %v147
    %v149 = vrot.slane %v37, %v148
    %v154 = vlaneseq
    %v155 = vshrl.u32 %v154, 7
    %v156 = vsub.s32 2, %v155
    %v157 = vrot.slane %v137, %v156
    %v158 = vlaneseq
    %v159 = vshrl.u32 %v158, 7
    %v160 = vsub.s32 2, %v159
    %v161 = vrot.slane %v141, %v160
    %v162 = vlaneseq
    %v163 = vshrl.u32 %v162, 7
    %v164 = vsub.s32 2, %v163
    %v165 = vrot.slane %v145, %v164
    %v166 = vlaneseq
    %v167 = vshrl.u32 %v166, 7
    %v168 = vsub.s32 2, %v167
    %v169 = vrot.slane %v149, %v168
    %170 = vset.pattern.permute.xlu0 2
    %171 = vperm.xlu0 %170, %v38
    %v172 = vpop.permute.xlu0 %171
    %v174 = vmul.f32 %v157, %v172
    %v175 = vmul.f32 %v161, %v172
    %v176 = vmul.f32 %v165, %v172
    %v177 = vmul.f32 %v169, %v172
    %v178 = vadd.f32 %v130, %v174
    %v179 = vadd.f32 %v131, %v175
    %v180 = vadd.f32 %v132, %v176
    %v181 = vadd.f32 %v133, %v177
    %v182 = vlaneseq
    %v183 = vshrl.u32 %v182, 7
    %v184 = vsub.s32 3, %v183
    %v185 = vrot.slane %v36, %v184
    %v186 = vlaneseq
    %v187 = vshrl.u32 %v186, 7
    %v188 = vsub.s32 7, %v187
    %v189 = vrot.slane %v36, %v188
    %v190 = vlaneseq
    %v191 = vshrl.u32 %v190, 7
    %v192 = vsub.s32 3, %v191
    %v193 = vrot.slane %v37, %v192
    %v194 = vlaneseq
    %v195 = vshrl.u32 %v194, 7
    %v196 = vsub.s32 7, %v195
    %v197 = vrot.slane %v37, %v196
    %v202 = vlaneseq
    %v203 = vshrl.u32 %v202, 7
    %v204 = vsub.s32 3, %v203
    %v205 = vrot.slane %v185, %v204
    %v206 = vlaneseq
    %v207 = vshrl.u32 %v206, 7
    %v208 = vsub.s32 3, %v207
    %v209 = vrot.slane %v189, %v208
    %v210 = vlaneseq
    %v211 = vshrl.u32 %v210, 7
    %v212 = vsub.s32 3, %v211
    %v213 = vrot.slane %v193, %v212
    %v214 = vlaneseq
    %v215 = vshrl.u32 %v214, 7
    %v216 = vsub.s32 3, %v215
    %v217 = vrot.slane %v197, %v216
    %218 = vset.pattern.permute.xlu0 3
    %219 = vperm.xlu0 %218, %v38
    %v220 = vpop.permute.xlu0 %219
    %v222 = vmul.f32 %v205, %v220
    %v223 = vmul.f32 %v209, %v220
    %v224 = vmul.f32 %v213, %v220
    %v225 = vmul.f32 %v217, %v220
    %v226 = vadd.f32 %v178, %v222
    %v227 = vadd.f32 %v179, %v223
    %v228 = vadd.f32 %v180, %v224
    %v229 = vadd.f32 %v181, %v225
    %v230 = vadd.f32 %v226, %v227
    %v231 = vadd.f32 %v230, %v228
    %v232 = vadd.f32 %v231, %v229
    %233 = vadd.xlane.f32.xlu0 %v232
    %v234 = vpop.xlane.xlu0 %233
    %v235 = vmul.f32 %v226, %v226
    %v236 = vmul.f32 %v227, %v227
    %v237 = vmul.f32 %v228, %v228
    %v238 = vmul.f32 %v229, %v229
    %v239 = vadd.f32 %v235, %v236
    %v240 = vadd.f32 %v239, %v237
    %v241 = vadd.f32 %v240, %v238
    %242 = vadd.xlane.f32.xlu0 %v241
    %v243 = vpop.xlane.xlu0 %242
    %v244 = vld [vmem:[#allocation5] sm:$0x3]
    %v246 = vlaneseq
    %v247 = vand.u32 %v246, 127
    %v248 = vlaneseq
    %v249 = vshrl.u32 %v248, 7
    %v250 = vsub.s32 %v247, %v249
    %v251 = vrot.slane %v234, %v250
    %v254 = vlaneseq
    %v255 = vshrl.u32 %v254, 7
    %v256 = vsub.s32 %v247, %v255
    %v257 = vrot.slane %v243, %v256
    %vm259 = vcmask 1040384
    %v260 = vsel %vm259, %v251, %v257
    %v261 = vadd.f32 %v244, %v260
    %vm262 = vcmask 58368
    %263 = vst.msk [vmem:[#allocation5] sm:$0x3] %vm262, %v261
    // Predicated region
    $region18: #{tpu_custom_call.1} parent=1 // pred_check
      _
    $region19: #{tpu_custom_call.1} parent=1 // pred_check_branch
      %265 = sbr.rel (0) target = $region21
    $region20: #{tpu_custom_call.1} parent=1 // pred_region
      %s267 = ssub.s32 32, 32
      %268 = vsyncadd [#allocation4], %s267
      %s270 = sshll.u32 [#allocation5], 4
      %s271 = int_to_ptr.vmem [resolvable:$true] %s270
      %273 = dma.vmem_to_hbm [thread:$0]  %s271, 32, %s2, [#allocation4]
    $region21: #{tpu_custom_call.1} parent=1 // pred_fallthru
      _
    // Predicated region
    $region22: #{tpu_custom_call.1} parent=1 // pred_check
      _
    $region23: #{tpu_custom_call.1} parent=1 // pred_check_branch
      %275 = sbr.rel (0) target = $region25
    $region24: #{tpu_custom_call.1} parent=1 // pred_region
      %276 = dma.done [#allocation4], 32
    $region25: #{tpu_custom_call.1} parent=1 // pred_fallthru
      _
    %277 = vsyncpa [#allocation3], 1
    %278 = vsyncpa [#allocation4], 1

</llo_original>
